<compile_context>
chip_gen: v6e
topology: v6e:2x2x1
jax: 0.10.0
libtpu: 0.0.40
codegen_flags: <defaults>
</compile_context>

<pallas_src>
import functools

import numpy as np
import jax
import jax.numpy as jnp
from jax.experimental import pallas as pl
from jax.experimental.pallas import tpu as pltpu


def _round_up(x, m):
    return (x + m - 1) // m * m


def _pick_divisor_tile(dim, cap=512):
    """Largest of {512, 256, 128} that divides dim (dim is a multiple of 128)."""
    for t in (cap, 256, 128):
        if t <= cap and dim % t == 0:
            return t
    return dim


# ----------------------------------------------------------------------------
# Fused path: all weights VMEM-resident, grid tiles only the row (M) dimension.
# ----------------------------------------------------------------------------
def _mlp_fused_kernel(x_ref, wh_ref, bh_ref, wo_ref, bo_ref, o_ref):
    # x_ref : (TM, Hp)    bf16 activation row tile (streamed)
    # wh_ref: (L, Hp, Hp) bf16 stacked hidden weights (in, out), VMEM-resident
    # bh_ref: (L, 1, Hp)  f32  stacked hidden biases
    # wo_ref: (Hp, Op)    bf16 output weight (in, out)
    # bo_ref: (1, Op)     f32  output bias
    # o_ref : (TM, Op)    bf16 output tile (lane-dense: Op % 128 == 0)
    n_layer = wh_ref.shape[0]
    h = x_ref[...]

    def layer(l, h):
        acc = jnp.dot(h.astype(jnp.bfloat16), wh_ref[l],
                      preferred_element_type=jnp.float32)   # bf16 MXU, f32 accumulate
        return jnp.maximum(acc + bh_ref[l], 0.0)             # bias + ReLU on VPU (f32)

    if n_layer <= 4:
        for l in range(n_layer):                             # short static unroll
            h = layer(l, h)
    else:
        # Rolled loop bounds vreg live ranges / VMEM spill for deep MLPs.
        h = jax.lax.fori_loop(0, n_layer, layer, h.astype(jnp.float32))

    # Dropout: eval-mode identity.
    # TODO(synk): training-mode dropout (pltpu.prng_seed / prng_random_bits mask) not implemented.
    out = jnp.dot(h.astype(jnp.bfloat16), wo_ref[...],
                  preferred_element_type=jnp.float32) + bo_ref[...]
    o_ref[...] = out.astype(o_ref.dtype)


def _fused_forward(x2, wh, bh, wo, bo, TM, vmem_budget, single_buffer_weights):
    M, H_pad = x2.shape
    L = wh.shape[0]
    O_pad = wo.shape[1]

    wmult = 1 if single_buffer_weights else 2
    weight_bytes = L * H_pad * H_pad * 2 + L * H_pad * 4 + H_pad * O_pad * 2 + O_pad * 4
    io_bytes = 2 * TM * H_pad * 2 + 2 * TM * O_pad * 2           # double-buffered bf16 tiles
    temp_bytes = 3 * TM * max(H_pad, O_pad) * 4                  # in-kernel f32 temporaries
    vmem_limit = int(min(max(wmult * weight_bytes + io_bytes + temp_bytes + (2 << 20),
                             32 << 20),
                         vmem_budget))

    def resident(shape):
        # Constant index_map -> stays VMEM-resident across the whole grid.
        idx = lambda i: (0,) * len(shape)
        if single_buffer_weights:
            return pl.BlockSpec(shape, idx, pipeline_mode=pl.Buffered(1))
        return pl.BlockSpec(shape, idx)

    flops = 2 * M * (L * H_pad * H_pad + H_pad * O_pad)
    bytes_accessed = M * H_pad * 2 + M * O_pad * 2 + weight_bytes

    return pl.pallas_call(
        _mlp_fused_kernel,
        out_shape=jax.ShapeDtypeStruct((M, O_pad), jnp.bfloat16),
        grid=(pl.cdiv(M, TM),),
        in_specs=[
            pl.BlockSpec((TM, H_pad), lambda i: (i, 0)),          # streamed activations
            resident((L, H_pad, H_pad)),                           # resident weights/biases
            resident((L, 1, H_pad)),
            resident((H_pad, O_pad)),
            resident((1, O_pad)),
        ],
        out_specs=pl.BlockSpec((TM, O_pad), lambda i: (i, 0)),     # lane-dense output
        compiler_params=pltpu.CompilerParams(
            dimension_semantics=("parallel",),
            vmem_limit_bytes=vmem_limit),
        cost_estimate=pl.CostEstimate(flops=flops, transcendentals=0,
                                      bytes_accessed=bytes_accessed),
    )(x2, wh, bh, wo, bo)


# ----------------------------------------------------------------------------
# Fallback path: per-layer (M, N, K)-tiled matmul + bias (+ ReLU), weights streamed.
# Used when resident weights would not fit per-TC VMEM.
# ----------------------------------------------------------------------------
def _linear_kernel(x_ref, w_ref, b_ref, o_ref, acc_ref, *, apply_relu):
    @pl.when(pl.program_id(2) == 0)
    def _():
        acc_ref[...] = jnp.zeros_like(acc_ref)

    acc_ref[...] += jnp.dot(x_ref[...], w_ref[...], preferred_element_type=jnp.float32)

    @pl.when(pl.program_id(2) == pl.num_programs(2) - 1)
    def _():
        out = acc_ref[...] + b_ref[...]
        if apply_relu:
            out = jnp.maximum(out, 0.0)
        o_ref[...] = out.astype(o_ref.dtype)


def _linear_tiled(x2, w, b, *, apply_relu, tm):
    M, K = x2.shape
    N = w.shape[1]
    tk = _pick_divisor_tile(K)       # must divide K exactly (reduction axis)
    tn = _pick_divisor_tile(N)       # divides N (padded to 128) -> pad cols are exact zeros
    tm = min(tm, _round_up(M, 16))
    grid = (pl.cdiv(M, tm), N // tn, K // tk)

    flops = 2 * M * K * N
    bytes_accessed = M * K * 2 + K * N * 2 + M * N * 2 + N * 4

    return pl.pallas_call(
        functools.partial(_linear_kernel, apply_relu=apply_relu),
        out_shape=jax.ShapeDtypeStruct((M, N), jnp.bfloat16),
        grid=grid,
        in_specs=[
            pl.BlockSpec((tm, tk), lambda i, j, k: (i, k)),
            pl.BlockSpec((tk, tn), lambda i, j, k: (k, j)),
            pl.BlockSpec((1, tn), lambda i, j, k: (0, j)),
        ],
        out_specs=pl.BlockSpec((tm, tn), lambda i, j, k: (i, j)),
        scratch_shapes=[pltpu.VMEM((tm, tn), jnp.float32)],
        compiler_params=pltpu.CompilerParams(
            dimension_semantics=("parallel", "parallel", "arbitrary")),
        cost_estimate=pl.CostEstimate(flops=flops, transcendentals=0,
                                      bytes_accessed=bytes_accessed),
    )(x2, w, b)


# ----------------------------------------------------------------------------
# Public wrapper.
# ----------------------------------------------------------------------------
def mlp_forward(x, hidden_ws, hidden_bs, out_w, out_b, *, tile_m=512, force_tiled=False):
    """x: (..., H). Returns (..., O). Matmuls in bf16 with f32 accumulation."""
    orig_shape = x.shape
    H = orig_shape[-1]
    M = int(np.prod(orig_shape[:-1]))
    O = out_w.shape[-1]
    L = len(hidden_ws)

    H_pad = _round_up(H, 128)
    O_pad = _round_up(O, 128)
    TM = min(_round_up(tile_m, 16), _round_up(M, 16))   # multiple of 16 (bf16 sublane-dense)

    # bf16 activation stream; lane-pad features only when needed. No copy/pad along M:
    # the grid uses pl.cdiv and boundary-block garbage rows are sliced off below.
    x2 = x.reshape(M, H).astype(jnp.bfloat16)
    if H_pad != H:
        x2 = jnp.pad(x2, ((0, 0), (0, H_pad - H)))

    wh = jnp.pad(jnp.stack(hidden_ws),
                 ((0, 0), (0, H_pad - H), (0, H_pad - H))).astype(jnp.bfloat16)   # (L,Hp,Hp)
    bh = jnp.pad(jnp.stack(hidden_bs), ((0, 0), (0, H_pad - H)))[:, None, :]      # (L,1,Hp) f32
    wo = jnp.pad(out_w, ((0, H_pad - H), (0, O_pad - O))).astype(jnp.bfloat16)    # (Hp,Op)
    bo = jnp.pad(out_b, (0, O_pad - O))[None, :]                                  # (1,Op)  f32

    # Generation-aware per-TensorCore VMEM budget (~85% of physical).
    try:
        vmem_cap = int(pltpu.get_tpu_info().vmem_capacity_bytes)
    except Exception:
        vmem_cap = 64 << 20        # conservative default (v7x per-TC size)
    vmem_budget = int(0.85 * vmem_cap)

    weight_bytes = L * H_pad * H_pad * 2 + L * H_pad * 4 + H_pad * O_pad * 2 + O_pad * 4
    io_bytes = 2 * TM * H_pad * 2 + 2 * TM * O_pad * 2
    temp_bytes = 3 * TM * max(H_pad, O_pad) * 4
    fused_fits = weight_bytes + io_bytes + temp_bytes + (2 << 20) <= vmem_budget

    if fused_fits and not force_tiled:
        try:
            out = _fused_forward(x2, wh, bh, wo, bo, TM, vmem_budget,
                                 single_buffer_weights=True)
        except Exception:
            # If this Pallas build rejects single-buffered (pl.Buffered(1)) resident
            # inputs, retry with the default double-buffering (same kernel, more VMEM).
            out = _fused_forward(x2, wh, bh, wo, bo, TM, vmem_budget,
                                 single_buffer_weights=False)
    else:
        # Resident weights exceed per-TC VMEM (or caller forced it): stream weights
        # with a per-layer tiled matmul; stays MXU-bound instead of failing to compile.
        h = x2
        for l in range(L):
            h = _linear_tiled(h, wh[l], bh[l], apply_relu=True, tm=TM)
        out = _linear_tiled(h, wo, bo, apply_relu=False, tm=TM)

    return out[:M, :O].astype(x.dtype).reshape(*orig_shape[:-1], O)


def mlp_reference(x, hidden_ws, hidden_bs, out_w, out_b):
    h = x
    for w, b in zip(hidden_ws, hidden_bs):
        h = jax.nn.relu(h @ w + b)
    return h @ out_w + out_b


if __name__ == "__main__":
    # Module config (small, consistent with MLP(n_layer, hidden_dim, output_dim, dpo))
    n_layer, hidden_dim, output_dim, dpo = 2, 32, 16, 0.1
    batch, seq = 2, 8

    key = jax.random.PRNGKey(0)
    keys = jax.random.split(key, 2 * n_layer + 3)

    # Deterministic params, PyTorch Linear-style uniform(-1/sqrt(fan_in), 1/sqrt(fan_in)).
    bound_h = 1.0 / np.sqrt(hidden_dim)
    hidden_ws = [jax.random.uniform(keys[2 * i], (hidden_dim, hidden_dim),
                                    jnp.float32, -bound_h, bound_h)
                 for i in range(n_layer)]
    hidden_bs = [jax.random.uniform(keys[2 * i + 1], (hidden_dim,),
                                    jnp.float32, -bound_h, bound_h)
                 for i in range(n_layer)]
    out_w = jax.random.uniform(keys[-3], (hidden_dim, output_dim),
                               jnp.float32, -bound_h, bound_h)
    out_b = jax.random.uniform(keys[-2], (output_dim,),
                               jnp.float32, -bound_h, bound_h)

    x = jax.random.normal(keys[-1], (batch, seq, hidden_dim), jnp.float32)

    y_ref = mlp_reference(x, hidden_ws, hidden_bs, out_w, out_b)

    # Fused (weights VMEM-resident) path.
    y = mlp_forward(x, hidden_ws, hidden_bs, out_w, out_b)
    y = jax.block_until_ready(y)
    # bf16 matmuls / activations vs pure-f32 reference -> loose tolerance.
    np.testing.assert_allclose(np.asarray(y), np.asarray(y_ref), rtol=5e-2, atol=5e-2)
    assert y.shape == (batch, seq, output_dim)

    # Exercise the streamed-weight fallback path as well (used when weights exceed VMEM).
    y_tiled = mlp_forward(x, hidden_ws, hidden_bs, out_w, out_b, force_tiled=True)
    y_tiled = jax.block_until_ready(y_tiled)
    np.testing.assert_allclose(np.asarray(y_tiled), np.asarray(y_ref), rtol=5e-2, atol=5e-2)

    print("KERNEL_OK")
</pallas_src>

<mosaic_0001>
module attributes {stable_mosaic.version = 11 : i64} {
  func.func @_mlp_fused_kernel(%arg0: i32, %arg1: memref<16x128xbf16, #tpu.memory_space<vmem>>, %arg2: memref<2x128x128xbf16, #tpu.memory_space<vmem>>, %arg3: memref<2x1x128xf32, #tpu.memory_space<vmem>>, %arg4: memref<128x128xbf16, #tpu.memory_space<vmem>>, %arg5: memref<1x128xf32, #tpu.memory_space<vmem>>, %arg6: memref<16x128xbf16, #tpu.memory_space<vmem>>) attributes {dimension_semantics = [#tpu.dimension_semantics<parallel>], iteration_bounds = array<i64: 1>, scalar_prefetch = 0 : i64, scratch_operands = 0 : i64, tpu.core_type = #tpu.core_type<tc>, window_params = [{transform_indices = @transform_0, window_bounds = array<i64: 16, 128>}, {pipeline_mode = #tpu.pipeline_mode<synchronous>, transform_indices = @transform_1, window_bounds = array<i64: 2, 128, 128>}, {pipeline_mode = #tpu.pipeline_mode<synchronous>, transform_indices = @transform_2, window_bounds = array<i64: 2, 1, 128>}, {pipeline_mode = #tpu.pipeline_mode<synchronous>, transform_indices = @transform_3, window_bounds = array<i64: 128, 128>}, {pipeline_mode = #tpu.pipeline_mode<synchronous>, transform_indices = @transform_4, window_bounds = array<i64: 1, 128>}, {transform_indices = @transform_5, window_bounds = array<i64: 16, 128>}]} {
    %c0 = arith.constant 0 : index
    %c0_0 = arith.constant 0 : index
    %0 = vector.load %arg1[%c0, %c0_0] : memref<16x128xbf16, #tpu.memory_space<vmem>>, vector<16x128xbf16>
    %c0_1 = arith.constant 0 : index
    %c0_2 = arith.constant 0 : index
    %c0_3 = arith.constant 0 : index
    %1 = vector.load %arg2[%c0_1, %c0_2, %c0_3] : memref<2x128x128xbf16, #tpu.memory_space<vmem>>, vector<1x128x128xbf16>
    %2 = vector.shape_cast %1 : vector<1x128x128xbf16> to vector<128x128xbf16>
    %cst = arith.constant dense<0.000000e+00> : vector<16x128xf32>
    %3 = tpu.matmul %0, %2, %cst {dimension_numbers = #tpu.dot_dimension_numbers<[1], [0], [0], [1], [0, 0, 1, 1], [], []>} : vector<16x128xbf16>, vector<128x128xbf16>, vector<16x128xf32> -> vector<16x128xf32>
    %c0_4 = arith.constant 0 : index
    %c0_5 = arith.constant 0 : index
    %c0_6 = arith.constant 0 : index
    %4 = vector.load %arg3[%c0_4, %c0_5, %c0_6] : memref<2x1x128xf32, #tpu.memory_space<vmem>>, vector<1x1x128xf32>
    %5 = vector.shape_cast %4 : vector<1x1x128xf32> to vector<1x128xf32>
    %6 = vector.broadcast %5 : vector<1x128xf32> to vector<16x128xf32>
    %7 = arith.addf %3, %6 : vector<16x128xf32>
    %cst_7 = arith.constant 0.000000e+00 : f32
    %8 = vector.broadcast %cst_7 : f32 to vector<16x128xf32>
    %9 = arith.maximumf %7, %8 : vector<16x128xf32>
    %10 = arith.truncf %9 : vector<16x128xf32> to vector<16x128xbf16>
    %c1 = arith.constant 1 : index
    %c0_8 = arith.constant 0 : index
    %c0_9 = arith.constant 0 : index
    %11 = vector.load %arg2[%c1, %c0_8, %c0_9] : memref<2x128x128xbf16, #tpu.memory_space<vmem>>, vector<1x128x128xbf16>
    %12 = vector.shape_cast %11 : vector<1x128x128xbf16> to vector<128x128xbf16>
    %cst_10 = arith.constant dense<0.000000e+00> : vector<16x128xf32>
    %13 = tpu.matmul %10, %12, %cst_10 {dimension_numbers = #tpu.dot_dimension_numbers<[1], [0], [0], [1], [0, 0, 1, 1], [], []>} : vector<16x128xbf16>, vector<128x128xbf16>, vector<16x128xf32> -> vector<16x128xf32>
    %c1_11 = arith.constant 1 : index
    %c0_12 = arith.constant 0 : index
    %c0_13 = arith.constant 0 : index
    %14 = vector.load %arg3[%c1_11, %c0_12, %c0_13] : memref<2x1x128xf32, #tpu.memory_space<vmem>>, vector<1x1x128xf32>
    %15 = vector.shape_cast %14 : vector<1x1x128xf32> to vector<1x128xf32>
    %16 = vector.broadcast %15 : vector<1x128xf32> to vector<16x128xf32>
    %17 = arith.addf %13, %16 : vector<16x128xf32>
    %cst_14 = arith.constant 0.000000e+00 : f32
    %18 = vector.broadcast %cst_14 : f32 to vector<16x128xf32>
    %19 = arith.maximumf %17, %18 : vector<16x128xf32>
    %20 = arith.truncf %19 : vector<16x128xf32> to vector<16x128xbf16>
    %c0_15 = arith.constant 0 : index
    %c0_16 = arith.constant 0 : index
    %21 = vector.load %arg4[%c0_15, %c0_16] : memref<128x128xbf16, #tpu.memory_space<vmem>>, vector<128x128xbf16>
    %cst_17 = arith.constant dense<0.000000e+00> : vector<16x128xf32>
    %22 = tpu.matmul %20, %21, %cst_17 {dimension_numbers = #tpu.dot_dimension_numbers<[1], [0], [0], [1], [0, 0, 1, 1], [], []>} : vector<16x128xbf16>, vector<128x128xbf16>, vector<16x128xf32> -> vector<16x128xf32>
    %c0_18 = arith.constant 0 : index
    %c0_19 = arith.constant 0 : index
    %23 = vector.load %arg5[%c0_18, %c0_19] : memref<1x128xf32, #tpu.memory_space<vmem>>, vector<1x128xf32>
    %24 = vector.broadcast %23 : vector<1x128xf32> to vector<16x128xf32>
    %25 = arith.addf %22, %24 : vector<16x128xf32>
    %26 = arith.truncf %25 : vector<16x128xf32> to vector<16x128xbf16>
    %c0_20 = arith.constant 0 : index
    %c0_21 = arith.constant 0 : index
    %27 = vector.load %arg6[%c0_20, %c0_21] : memref<16x128xbf16, #tpu.memory_space<vmem>>, vector<16x128xbf16>
    tpu.vector_store %arg6[%c0_20, %c0_21], %26 {strides = array<i32>} : memref<16x128xbf16, #tpu.memory_space<vmem>>, vector<16x128xbf16>,
    return
  }
  func.func @transform_0(%arg0: i32) -> (i32, i32) {
    %c0_i32 = arith.constant 0 : i32
    %c0_i32_0 = arith.constant 0 : i32
    return %arg0, %c0_i32 : i32, i32
  }
  func.func @transform_1(%arg0: i32) -> (i32, i32, i32) {
    %c0_i32 = arith.constant 0 : i32
    %c0_i32_0 = arith.constant 0 : i32
    %c0_i32_1 = arith.constant 0 : i32
    %c0_i32_2 = arith.constant 0 : i32
    return %c0_i32, %c0_i32_0, %c0_i32_1 : i32, i32, i32
  }
  func.func @transform_2(%arg0: i32) -> (i32, i32, i32) {
    %c0_i32 = arith.constant 0 : i32
    %c0_i32_0 = arith.constant 0 : i32
    %c0_i32_1 = arith.constant 0 : i32
    %c0_i32_2 = arith.constant 0 : i32
    return %c0_i32, %c0_i32_0, %c0_i32_1 : i32, i32, i32
  }
  func.func @transform_3(%arg0: i32) -> (i32, i32) {
    %c0_i32 = arith.constant 0 : i32
    %c0_i32_0 = arith.constant 0 : i32
    %c0_i32_1 = arith.constant 0 : i32
    return %c0_i32, %c0_i32_0 : i32, i32
  }
  func.func @transform_4(%arg0: i32) -> (i32, i32) {
    %c0_i32 = arith.constant 0 : i32
    %c0_i32_0 = arith.constant 0 : i32
    %c0_i32_1 = arith.constant 0 : i32
    return %c0_i32, %c0_i32_0 : i32, i32
  }
  func.func @transform_5(%arg0: i32) -> (i32, i32) {
    %c0_i32 = arith.constant 0 : i32
    %c0_i32_0 = arith.constant 0 : i32
    return %arg0, %c0_i32 : i32, i32
  }
}

module attributes {stable_mosaic.version = 11 : i64} {
  func.func @_mlp_fused_kernel(%arg0: i32, %arg1: memref<16x128xbf16, #tpu.memory_space<vmem>>, %arg2: memref<2x128x128xbf16, #tpu.memory_space<vmem>>, %arg3: memref<2x1x128xf32, #tpu.memory_space<vmem>>, %arg4: memref<128x128xbf16, #tpu.memory_space<vmem>>, %arg5: memref<1x128xf32, #tpu.memory_space<vmem>>, %arg6: memref<16x128xbf16, #tpu.memory_space<vmem>>) attributes {dimension_semantics = [#tpu.dimension_semantics<parallel>], iteration_bounds = array<i64: 1>, scalar_prefetch = 0 : i64, scratch_operands = 0 : i64, tpu.core_type = #tpu.core_type<tc>, window_params = [{transform_indices = @transform_0, window_bounds = array<i64: 16, 128>}, {pipeline_mode = #tpu.pipeline_mode<synchronous>, transform_indices = @transform_1, window_bounds = array<i64: 2, 128, 128>}, {pipeline_mode = #tpu.pipeline_mode<synchronous>, transform_indices = @transform_2, window_bounds = array<i64: 2, 1, 128>}, {pipeline_mode = #tpu.pipeline_mode<synchronous>, transform_indices = @transform_3, window_bounds = array<i64: 128, 128>}, {pipeline_mode = #tpu.pipeline_mode<synchronous>, transform_indices = @transform_4, window_bounds = array<i64: 1, 128>}, {transform_indices = @transform_5, window_bounds = array<i64: 16, 128>}]} {
    %c0 = arith.constant 0 : index
    %c0_0 = arith.constant 0 : index
    %0 = vector.load %arg1[%c0, %c0_0] : memref<16x128xbf16, #tpu.memory_space<vmem>>, vector<16x128xbf16>
    %c0_1 = arith.constant 0 : index
    %c0_2 = arith.constant 0 : index
    %c0_3 = arith.constant 0 : index
    %1 = vector.load %arg2[%c0_1, %c0_2, %c0_3] : memref<2x128x128xbf16, #tpu.memory_space<vmem>>, vector<1x128x128xbf16>
    %2 = vector.shape_cast %1 : vector<1x128x128xbf16> to vector<128x128xbf16>
    %cst = arith.constant dense<0.000000e+00> : vector<16x128xf32>
    %3 = tpu.matmul %0, %2, %cst {dimension_numbers = #tpu.dot_dimension_numbers<[1], [0], [0], [1], [0, 0, 1, 1], [], []>} : vector<16x128xbf16>, vector<128x128xbf16>, vector<16x128xf32> -> vector<16x128xf32>
    %c0_4 = arith.constant 0 : index
    %c0_5 = arith.constant 0 : index
    %c0_6 = arith.constant 0 : index
    %4 = vector.load %arg3[%c0_4, %c0_5, %c0_6] : memref<2x1x128xf32, #tpu.memory_space<vmem>>, vector<1x1x128xf32>
    %5 = vector.shape_cast %4 : vector<1x1x128xf32> to vector<1x128xf32>
    %6 = vector.broadcast %5 : vector<1x128xf32> to vector<16x128xf32>
    %7 = arith.addf %3, %6 : vector<16x128xf32>
    %cst_7 = arith.constant 0.000000e+00 : f32
    %8 = vector.broadcast %cst_7 : f32 to vector<16x128xf32>
    %9 = arith.maximumf %7, %8 : vector<16x128xf32>
    %10 = arith.truncf %9 : vector<16x128xf32> to vector<16x128xbf16>
    %c1 = arith.constant 1 : index
    %c0_8 = arith.constant 0 : index
    %c0_9 = arith.constant 0 : index
    %11 = vector.load %arg2[%c1, %c0_8, %c0_9] : memref<2x128x128xbf16, #tpu.memory_space<vmem>>, vector<1x128x128xbf16>
    %12 = vector.shape_cast %11 : vector<1x128x128xbf16> to vector<128x128xbf16>
    %cst_10 = arith.constant dense<0.000000e+00> : vector<16x128xf32>
    %13 = tpu.matmul %10, %12, %cst_10 {dimension_numbers = #tpu.dot_dimension_numbers<[1], [0], [0], [1], [0, 0, 1, 1], [], []>} : vector<16x128xbf16>, vector<128x128xbf16>, vector<16x128xf32> -> vector<16x128xf32>
    %c1_11 = arith.constant 1 : index
    %c0_12 = arith.constant 0 : index
    %c0_13 = arith.constant 0 : index
    %14 = vector.load %arg3[%c1_11, %c0_12, %c0_13] : memref<2x1x128xf32, #tpu.memory_space<vmem>>, vector<1x1x128xf32>
    %15 = vector.shape_cast %14 : vector<1x1x128xf32> to vector<1x128xf32>
    %16 = vector.broadcast %15 : vector<1x128xf32> to vector<16x128xf32>
    %17 = arith.addf %13, %16 : vector<16x128xf32>
    %cst_14 = arith.constant 0.000000e+00 : f32
    %18 = vector.broadcast %cst_14 : f32 to vector<16x128xf32>
    %19 = arith.maximumf %17, %18 : vector<16x128xf32>
    %20 = arith.truncf %19 : vector<16x128xf32> to vector<16x128xbf16>
    %c0_15 = arith.constant 0 : index
    %c0_16 = arith.constant 0 : index
    %21 = vector.load %arg4[%c0_15, %c0_16] : memref<128x128xbf16, #tpu.memory_space<vmem>>, vector<128x128xbf16>
    %cst_17 = arith.constant dense<0.000000e+00> : vector<16x128xf32>
    %22 = tpu.matmul %20, %21, %cst_17 {dimension_numbers = #tpu.dot_dimension_numbers<[1], [0], [0], [1], [0, 0, 1, 1], [], []>} : vector<16x128xbf16>, vector<128x128xbf16>, vector<16x128xf32> -> vector<16x128xf32>
    %c0_18 = arith.constant 0 : index
    %c0_19 = arith.constant 0 : index
    %23 = vector.load %arg5[%c0_18, %c0_19] : memref<1x128xf32, #tpu.memory_space<vmem>>, vector<1x128xf32>
    %24 = vector.broadcast %23 : vector<1x128xf32> to vector<16x128xf32>
    %25 = arith.addf %22, %24 : vector<16x128xf32>
    %26 = arith.truncf %25 : vector<16x128xf32> to vector<16x128xbf16>
    %c0_20 = arith.constant 0 : index
    %c0_21 = arith.constant 0 : index
    %27 = vector.load %arg6[%c0_20, %c0_21] : memref<16x128xbf16, #tpu.memory_space<vmem>>, vector<16x128xbf16>
    tpu.vector_store %arg6[%c0_20, %c0_21], %26 {strides = array<i32>} : memref<16x128xbf16, #tpu.memory_space<vmem>>, vector<16x128xbf16>,
    return
  }
  func.func @transform_0(%arg0: i32) -> (i32, i32) {
    %c0_i32 = arith.constant 0 : i32
    %c0_i32_0 = arith.constant 0 : i32
    return %arg0, %c0_i32 : i32, i32
  }
  func.func @transform_1(%arg0: i32) -> (i32, i32, i32) {
    %c0_i32 = arith.constant 0 : i32
    %c0_i32_0 = arith.constant 0 : i32
    %c0_i32_1 = arith.constant 0 : i32
    %c0_i32_2 = arith.constant 0 : i32
    return %c0_i32, %c0_i32_0, %c0_i32_1 : i32, i32, i32
  }
  func.func @transform_2(%arg0: i32) -> (i32, i32, i32) {
    %c0_i32 = arith.constant 0 : i32
    %c0_i32_0 = arith.constant 0 : i32
    %c0_i32_1 = arith.constant 0 : i32
    %c0_i32_2 = arith.constant 0 : i32
    return %c0_i32, %c0_i32_0, %c0_i32_1 : i32, i32, i32
  }
  func.func @transform_3(%arg0: i32) -> (i32, i32) {
    %c0_i32 = arith.constant 0 : i32
    %c0_i32_0 = arith.constant 0 : i32
    %c0_i32_1 = arith.constant 0 : i32
    return %c0_i32, %c0_i32_0 : i32, i32
  }
  func.func @transform_4(%arg0: i32) -> (i32, i32) {
    %c0_i32 = arith.constant 0 : i32
    %c0_i32_0 = arith.constant 0 : i32
    %c0_i32_1 = arith.constant 0 : i32
    return %c0_i32, %c0_i32_0 : i32, i32
  }
  func.func @transform_5(%arg0: i32) -> (i32, i32) {
    %c0_i32 = arith.constant 0 : i32
    %c0_i32_0 = arith.constant 0 : i32
    return %arg0, %c0_i32 : i32, i32
  }
}

</mosaic_0001>

<llo_original>
// kernel: tpu_custom_call.1
$region0: #{tpu_custom_call.1}
  #allocation0 [shape = 'u32[]', space=smem, size = 0x4, offset = 0x4, fixed_abs, tag = 'smem constant byte address 0x4 - core index']
  #allocation1 [shape = 'u32[144,128]{1,0:T(1,128)}', space=vmem, size = 0x12000, scoped, tag = 'internal scratch']
  %s0 = inlined_call_operand.hbm [shape: bf16[16,128], index: 0, kind: input, shape index: {}]
  %s1 = inlined_call_operand.hbm [shape: bf16[2,128,128], index: 1, kind: input, shape index: {}]
  %s2 = inlined_call_operand.vmem [shape: f32[2,1,128], index: 2, kind: input, shape index: {}]
  %s3 = inlined_call_operand.hbm [shape: bf16[128,128], index: 3, kind: input, shape index: {}]
  %s4 = inlined_call_operand.vmem [shape: f32[1,128], index: 4, kind: input, shape index: {}]
  %s5 = inlined_call_operand.hbm [shape: bf16[16,128], index: 5, kind: output, shape index: {}]
  %s6 = sld [smem:[#allocation0]]
  $region42: #{tpu_custom_call.1} parent=0
    _
  %s8 = ssub.s32 1, %s6
  %s9 = scalar_select 0, %s8, %s6
  $region1: #{tpu_custom_call.1} parent=0
    #allocation2 [shape = 'u8[4096]{0}', space=vmem, size = 0x1000, scoped, tag = 'input window, operand 0, single buffered']
    #allocation3 [shape = 's32[1]{0}', space=sflag, size = 0x4, scoped, tag = 'scoped memory for tpu_custom_call.1']
    #allocation4 [shape = 's32[1]{0}', space=sflag, size = 0x4, scoped, tag = 'scoped memory for tpu_custom_call.1']
    #allocation5 [shape = 'u8[65536]{0}', space=vmem, size = 0x10000, scoped, tag = 'input window, operand 1, single buffered']
    #allocation6 [shape = 's32[1]{0}', space=sflag, size = 0x4, scoped, tag = 'scoped memory for tpu_custom_call.1']
    #allocation7 [shape = 'u8[32768]{0}', space=vmem, size = 0x8000, scoped, tag = 'input window, operand 3, single buffered']
    #allocation8 [shape = 'u8[4096]{0}', space=vmem, size = 0x1000, scoped, tag = 'output window, operand 0, single buffered']
    %10 = vsyncpa [#allocation3], 0
    %11 = vsyncpa [#allocation6], 0
    %12 = vsyncpa [#allocation4], 0
    // Predicated region
    $region2: #{tpu_custom_call.1} parent=1 // pred_check
      _
    $region3: #{tpu_custom_call.1} parent=1 // pred_check_branch
      %14 = sbr.rel (0) target = $region5
    $region4: #{tpu_custom_call.1} parent=1 // pred_region
      %s16 = ssub.s32 128, 128
      %17 = vsyncadd [#allocation3], %s16
      %s18 = sshll.u32 [#allocation2], 4
      %s19 = int_to_ptr.vmem [resolvable:$true] %s18
      %24 = dma.hbm_to_vmem [thread:$0]  %s0, 128, %s19, [#allocation3], 64, 64, 4
    $region5: #{tpu_custom_call.1} parent=1 // pred_fallthru
      _
    // Predicated region
    $region6: #{tpu_custom_call.1} parent=1 // pred_check
      _
    $region7: #{tpu_custom_call.1} parent=1 // pred_check_branch
      %26 = sbr.rel (0) target = $region9
    $region8: #{tpu_custom_call.1} parent=1 // pred_region
      %s28 = ssub.s32 2048, 2048
      %29 = vsyncadd [#allocation6], %s28
      %s30 = sshll.u32 [#allocation5], 4
      %s31 = int_to_ptr.vmem [resolvable:$true] %s30
      %36 = dma.hbm_to_vmem [thread:$0]  %s1, 2048, %s31, [#allocation6], 64, 64, 4
    $region9: #{tpu_custom_call.1} parent=1 // pred_fallthru
      _
    // Predicated region
    $region10: #{tpu_custom_call.1} parent=1 // pred_check
      _
    $region11: #{tpu_custom_call.1} parent=1 // pred_check_branch
      %38 = sbr.rel (0) target = $region13
    $region12: #{tpu_custom_call.1} parent=1 // pred_region
      _
    $region13: #{tpu_custom_call.1} parent=1 // pred_fallthru
      _
    // Predicated region
    $region14: #{tpu_custom_call.1} parent=1 // pred_check
      _
    $region15: #{tpu_custom_call.1} parent=1 // pred_check_branch
      %40 = sbr.rel (0) target = $region17
    $region16: #{tpu_custom_call.1} parent=1 // pred_region
      %s42 = ssub.s32 1024, 1024
      %43 = vsyncadd [#allocation6], %s42
      %s44 = sshll.u32 [#allocation7], 4
      %s45 = int_to_ptr.vmem [resolvable:$true] %s44
      %50 = dma.hbm_to_vmem [thread:$0]  %s3, 1024, %s45, [#allocation6], 64, 64, 4
    $region17: #{tpu_custom_call.1} parent=1 // pred_fallthru
      _
    // Predicated region
    $region18: #{tpu_custom_call.1} parent=1 // pred_check
      _
    $region19: #{tpu_custom_call.1} parent=1 // pred_check_branch
      %52 = sbr.rel (0) target = $region21
    $region20: #{tpu_custom_call.1} parent=1 // pred_region
      _
    $region21: #{tpu_custom_call.1} parent=1 // pred_fallthru
      _
    // Predicated region
    $region22: #{tpu_custom_call.1} parent=1 // pred_check
      _
    $region23: #{tpu_custom_call.1} parent=1 // pred_check_branch
      %54 = sbr.rel (0) target = $region25
    $region24: #{tpu_custom_call.1} parent=1 // pred_region
      %55 = dma.done [#allocation3], 128
    $region25: #{tpu_custom_call.1} parent=1 // pred_fallthru
      _
    // Predicated region
    $region26: #{tpu_custom_call.1} parent=1 // pred_check
      _
    $region27: #{tpu_custom_call.1} parent=1 // pred_check_branch
      %57 = sbr.rel (0) target = $region29
    $region28: #{tpu_custom_call.1} parent=1 // pred_region
      %58 = dma.done [#allocation6], 2048
    $region29: #{tpu_custom_call.1} parent=1 // pred_fallthru
      _
    // Predicated region
    $region30: #{tpu_custom_call.1} parent=1 // pred_check
      _
    $region31: #{tpu_custom_call.1} parent=1 // pred_check_branch
      %60 = sbr.rel (0) target = $region33
    $region32: #{tpu_custom_call.1} parent=1 // pred_region
      %61 = dma.done [#allocation6], 1024
    $region33: #{tpu_custom_call.1} parent=1 // pred_fallthru
      _
    %v63 = vld [vmem:[#allocation2] sm:$0xf]
    %v64 = vld [vmem:[#allocation2 + $0x4] sm:$0xf]
    %v65 = vld [vmem:[#allocation5] sm:$0xf]
    %v66 = vld [vmem:[#allocation5 + $0x4] sm:$0xf]
    %v67 = vld [vmem:[#allocation5 + $0x8] sm:$0xf]
    %v68 = vld [vmem:[#allocation5 + $0xc] sm:$0xf]
    %v69 = vld [vmem:[#allocation5 + $0x10] sm:$0xf]
    %v70 = vld [vmem:[#allocation5 + $0x14] sm:$0xf]
    %v71 = vld [vmem:[#allocation5 + $0x18] sm:$0xf]
    %v72 = vld [vmem:[#allocation5 + $0x1c] sm:$0xf]
    %v73 = vld [vmem:[#allocation5 + $0x20] sm:$0xf]
    %v74 = vld [vmem:[#allocation5 + $0x24] sm:$0xf]
    %v75 = vld [vmem:[#allocation5 + $0x28] sm:$0xf]
    %v76 = vld [vmem:[#allocation5 + $0x2c] sm:$0xf]
    %v77 = vld [vmem:[#allocation5 + $0x30] sm:$0xf]
    %v78 = vld [vmem:[#allocation5 + $0x34] sm:$0xf]
    %v79 = vld [vmem:[#allocation5 + $0x38] sm:$0xf]
    %v80 = vld [vmem:[#allocation5 + $0x3c] sm:$0xf]
    %v81 = vld [vmem:[%s2] sm:$0x1]
    %v83 = vlaneseq
    %v84 = vshrl.u32 %v83, 7
    %v85 = vsub.s32 0, %v84
    %v86 = vrot.slane %v81, %v85
    %v90 = vunpack.c.l.b16 %v63
    %v91 = vunpack.c.l.b16 %v64
    %v92 = vpack.c.b16 %v91, %v90
    %v110 = vunpack.c.l.b16 %v65
    %v111 = vunpack.c.l.b16 %v66
    %v112 = vunpack.c.l.b16 %v67
    %v113 = vunpack.c.l.b16 %v68
    %v114 = vunpack.c.l.b16 %v69
    %v115 = vunpack.c.l.b16 %v70
    %v116 = vunpack.c.l.b16 %v71
    %v117 = vunpack.c.l.b16 %v72
    %v118 = vunpack.c.l.b16 %v73
    %v119 = vunpack.c.l.b16 %v74
    %v120 = vunpack.c.l.b16 %v75
    %v121 = vunpack.c.l.b16 %v76
    %v122 = vunpack.c.l.b16 %v77
    %v123 = vunpack.c.l.b16 %v78
    %v124 = vunpack.c.l.b16 %v79
    %v125 = vunpack.c.l.b16 %v80
    %v126 = vpack.c.b16 %v111, %v110
    %v127 = vpack.c.b16 %v113, %v112
    %v128 = vpack.c.b16 %v115, %v114
    %v129 = vpack.c.b16 %v117, %v116
    %v130 = vpack.c.b16 %v119, %v118
    %v131 = vpack.c.b16 %v121, %v120
    %v132 = vpack.c.b16 %v123, %v122
    %v133 = vpack.c.b16 %v125, %v124
    %142 = vmatprep.subr.bf16.mxu0 0
    %143 = vmatpush1.bf16.msra.mxu0 %v133
    %144 = vmatprep.subr.bf16.mxu0 0
    %145 = vmatpush1.bf16.msra.mxu0 %v132
    %146 = vmatprep.subr.bf16.mxu0 0
    %147 = vmatpush1.bf16.msra.mxu0 %v131
    %148 = vmatprep.subr.bf16.mxu0 0
    %149 = vmatpush1.bf16.msra.mxu0 %v130
    %150 = vmatprep.subr.bf16.mxu0 0
    %151 = vmatpush1.bf16.msra.mxu0 %v129
    %152 = vmatprep.subr.bf16.mxu0 0
    %153 = vmatpush1.bf16.msra.mxu0 %v128
    %154 = vmatprep.subr.bf16.mxu0 0
    %155 = vmatpush1.bf16.msra.mxu0 %v127
    %156 = vmatprep.subr.bf16.mxu0 0
    %157 = vmatpush1.bf16.msra.mxu0 %v126
    %158 = vmatprep.subr.bf16.mxu0 0
    %159 = vmatpush2.bf16.msra.mxu0 0
    %160 = vmatprep.subr.bf16.mxu0 0
    %161 = vmatpush2.bf16.msra.mxu0 0
    %162 = vmatprep.subr.bf16.mxu0 0
    %163 = vmatpush2.bf16.msra.mxu0 0
    %164 = vmatprep.subr.bf16.mxu0 0
    %165 = vmatpush2.bf16.msra.mxu0 0
    %166 = vmatprep.subr.bf16.mxu0 0
    %167 = vmatpush2.bf16.msra.mxu0 0
    %168 = vmatprep.subr.bf16.mxu0 0
    %169 = vmatpush2.bf16.msra.mxu0 0
    %170 = vmatprep.subr.bf16.mxu0 0
    %171 = vmatpush2.bf16.msra.mxu0 0
    %172 = vmatprep.subr.bf16.mxu0 0
    %173 = vmatpush2.bf16.msra.mxu0 0
    %174 = vmatprep.mubr.bf16.mxu0 0
    %175 = vmatmul.mubr.bf16.gmra.mxu0 %v92
    %v176 = vpop.f32.mrf.mxu0
    %v177 = vadd.f32 %v86, %v176
    %v178 = vpop.f32.mrf.mxu0
    %v179 = vpop.f32.mrf.mxu0
    %v180 = vadd.f32 %v86, %v179
    %v181 = vpop.f32.mrf.mxu0
    %182 = vdwg.mxu0
    %v183 = vmax.f32 %v177, 0.0
    %v184 = vmax.f32 %v180, 0.0
    %v185 = vpack.c.bf16 %v184, %v183
    %s186 = scalar_lea.vmem [#allocation5], 64
    %v187 = vld [vmem:[%s186] sm:$0xf]
    %v188 = vld [vmem:[%s186 + $0x4] sm:$0xf]
    %v189 = vld [vmem:[%s186 + $0x8] sm:$0xf]
    %v190 = vld [vmem:[%s186 + $0xc] sm:$0xf]
    %v191 = vld [vmem:[%s186 + $0x10] sm:$0xf]
    %v192 = vld [vmem:[%s186 + $0x14] sm:$0xf]
    %v193 = vld [vmem:[%s186 + $0x18] sm:$0xf]
    %v194 = vld [vmem:[%s186 + $0x1c] sm:$0xf]
    %v195 = vld [vmem:[%s186 + $0x20] sm:$0xf]
    %v196 = vld [vmem:[%s186 + $0x24] sm:$0xf]
    %v197 = vld [vmem:[%s186 + $0x28] sm:$0xf]
    %v198 = vld [vmem:[%s186 + $0x2c] sm:$0xf]
    %v199 = vld [vmem:[%s186 + $0x30] sm:$0xf]
    %v200 = vld [vmem:[%s186 + $0x34] sm:$0xf]
    %v201 = vld [vmem:[%s186 + $0x38] sm:$0xf]
    %v202 = vld [vmem:[%s186 + $0x3c] sm:$0xf]
    %s203 = scalar_lea.vmem %s2, 1
    %v204 = vld [vmem:[%s203] sm:$0x1]
    %v206 = vlaneseq
    %v207 = vshrl.u32 %v206, 7
    %v208 = vsub.s32 0, %v207
    %v209 = vrot.slane %v204, %v208
    %v227 = vunpack.c.l.b16 %v187
    %v228 = vunpack.c.l.b16 %v188
    %v229 = vunpack.c.l.b16 %v189
    %v230 = vunpack.c.l.b16 %v190
    %v231 = vunpack.c.l.b16 %v191
    %v232 = vunpack.c.l.b16 %v192
    %v233 = vunpack.c.l.b16 %v193
    %v234 = vunpack.c.l.b16 %v194
    %v235 = vunpack.c.l.b16 %v195
    %v236 = vunpack.c.l.b16 %v196
    %v237 = vunpack.c.l.b16 %v197
    %v238 = vunpack.c.l.b16 %v198
    %v239 = vunpack.c.l.b16 %v199
    %v240 = vunpack.c.l.b16 %v200
    %v241 = vunpack.c.l.b16 %v201
    %v242 = vunpack.c.l.b16 %v202
    %v243 = vpack.c.b16 %v228, %v227
    %v244 = vpack.c.b16 %v230, %v229
    %v245 = vpack.c.b16 %v232, %v231
    %v246 = vpack.c.b16 %v234, %v233
    %v247 = vpack.c.b16 %v236, %v235
    %v248 = vpack.c.b16 %v238, %v237
    %v249 = vpack.c.b16 %v240, %v239
    %v250 = vpack.c.b16 %v242, %v241
    %259 = vmatprep.subr.bf16.mxu0 0
    %260 = vmatpush1.bf16.msra.mxu0 %v250
    %261 = vmatprep.subr.bf16.mxu0 0
    %262 = vmatpush1.bf16.msra.mxu0 %v249
    %263 = vmatprep.subr.bf16.mxu0 0
    %264 = vmatpush1.bf16.msra.mxu0 %v248
    %265 = vmatprep.subr.bf16.mxu0 0
    %266 = vmatpush1.bf16.msra.mxu0 %v247
    %267 = vmatprep.subr.bf16.mxu0 0
    %268 = vmatpush1.bf16.msra.mxu0 %v246
    %269 = vmatprep.subr.bf16.mxu0 0
    %270 = vmatpush1.bf16.msra.mxu0 %v245
    %271 = vmatprep.subr.bf16.mxu0 0
    %272 = vmatpush1.bf16.msra.mxu0 %v244
    %273 = vmatprep.subr.bf16.mxu0 0
    %274 = vmatpush1.bf16.msra.mxu0 %v243
    %275 = vmatprep.subr.bf16.mxu0 0
    %276 = vmatpush2.bf16.msra.mxu0 0
    %277 = vmatprep.subr.bf16.mxu0 0
    %278 = vmatpush2.bf16.msra.mxu0 0
    %279 = vmatprep.subr.bf16.mxu0 0
    %280 = vmatpush2.bf16.msra.mxu0 0
    %281 = vmatprep.subr.bf16.mxu0 0
    %282 = vmatpush2.bf16.msra.mxu0 0
    %283 = vmatprep.subr.bf16.mxu0 0
    %284 = vmatpush2.bf16.msra.mxu0 0
    %285 = vmatprep.subr.bf16.mxu0 0
    %286 = vmatpush2.bf16.msra.mxu0 0
    %287 = vmatprep.subr.bf16.mxu0 0
    %288 = vmatpush2.bf16.msra.mxu0 0
    %289 = vmatprep.subr.bf16.mxu0 0
    %290 = vmatpush2.bf16.msra.mxu0 0
    %291 = vmatprep.mubr.bf16.mxu0 0
    %292 = vmatmul.mubr.bf16.gmra.mxu0 %v185
    %v293 = vpop.f32.mrf.mxu0
    %v294 = vadd.f32 %v209, %v293
    %v295 = vpop.f32.mrf.mxu0
    %v296 = vpop.f32.mrf.mxu0
    %v297 = vadd.f32 %v209, %v296
    %v298 = vpop.f32.mrf.mxu0
    %299 = vdwg.mxu0
    %v300 = vmax.f32 %v294, 0.0
    %v301 = vmax.f32 %v297, 0.0
    %v302 = vpack.c.bf16 %v301, %v300
    %v303 = vld [vmem:[#allocation7] sm:$0xf]
    %v304 = vld [vmem:[#allocation7 + $0x4] sm:$0xf]
    %v305 = vld [vmem:[#allocation7 + $0x8] sm:$0xf]
    %v306 = vld [vmem:[#allocation7 + $0xc] sm:$0xf]
    %v307 = vld [vmem:[#allocation7 + $0x10] sm:$0xf]
    %v308 = vld [vmem:[#allocation7 + $0x14] sm:$0xf]
    %v309 = vld [vmem:[#allocation7 + $0x18] sm:$0xf]
    %v310 = vld [vmem:[#allocation7 + $0x1c] sm:$0xf]
    %v311 = vld [vmem:[#allocation7 + $0x20] sm:$0xf]
    %v312 = vld [vmem:[#allocation7 + $0x24] sm:$0xf]
    %v313 = vld [vmem:[#allocation7 + $0x28] sm:$0xf]
    %v314 = vld [vmem:[#allocation7 + $0x2c] sm:$0xf]
    %v315 = vld [vmem:[#allocation7 + $0x30] sm:$0xf]
    %v316 = vld [vmem:[#allocation7 + $0x34] sm:$0xf]
    %v317 = vld [vmem:[#allocation7 + $0x38] sm:$0xf]
    %v318 = vld [vmem:[#allocation7 + $0x3c] sm:$0xf]
    %v319 = vld [vmem:[%s4] sm:$0x1]
    %v321 = vlaneseq
    %v322 = vshrl.u32 %v321, 7
    %v323 = vsub.s32 0, %v322
    %v324 = vrot.slane %v319, %v323
    %v342 = vunpack.c.l.b16 %v303
    %v343 = vunpack.c.l.b16 %v304
    %v344 = vunpack.c.l.b16 %v305
    %v345 = vunpack.c.l.b16 %v306
    %v346 = vunpack.c.l.b16 %v307
    %v347 = vunpack.c.l.b16 %v308
    %v348 = vunpack.c.l.b16 %v309
    %v349 = vunpack.c.l.b16 %v310
    %v350 = vunpack.c.l.b16 %v311
    %v351 = vunpack.c.l.b16 %v312
    %v352 = vunpack.c.l.b16 %v313
    %v353 = vunpack.c.l.b16 %v314
    %v354 = vunpack.c.l.b16 %v315
    %v355 = vunpack.c.l.b16 %v316
    %v356 = vunpack.c.l.b16 %v317
    %v357 = vunpack.c.l.b16 %v318
    %v358 = vpack.c.b16 %v343, %v342
    %v359 = vpack.c.b16 %v345, %v344
    %v360 = vpack.c.b16 %v347, %v346
    %v361 = vpack.c.b16 %v349, %v348
    %v362 = vpack.c.b16 %v351, %v350
    %v363 = vpack.c.b16 %v353, %v352
    %v364 = vpack.c.b16 %v355, %v354
    %v365 = vpack.c.b16 %v357, %v356
    %374 = vmatprep.subr.bf16.mxu0 0
    %375 = vmatpush1.bf16.msra.mxu0 %v365
    %376 = vmatprep.subr.bf16.mxu0 0
    %377 = vmatpush1.bf16.msra.mxu0 %v364
    %378 = vmatprep.subr.bf16.mxu0 0
    %379 = vmatpush1.bf16.msra.mxu0 %v363
    %380 = vmatprep.subr.bf16.mxu0 0
    %381 = vmatpush1.bf16.msra.mxu0 %v362
    %382 = vmatprep.subr.bf16.mxu0 0
    %383 = vmatpush1.bf16.msra.mxu0 %v361
    %384 = vmatprep.subr.bf16.mxu0 0
    %385 = vmatpush1.bf16.msra.mxu0 %v360
    %386 = vmatprep.subr.bf16.mxu0 0
    %387 = vmatpush1.bf16.msra.mxu0 %v359
    %388 = vmatprep.subr.bf16.mxu0 0
    %389 = vmatpush1.bf16.msra.mxu0 %v358
    %390 = vmatprep.subr.bf16.mxu0 0
    %391 = vmatpush2.bf16.msra.mxu0 0
    %392 = vmatprep.subr.bf16.mxu0 0
    %393 = vmatpush2.bf16.msra.mxu0 0
    %394 = vmatprep.subr.bf16.mxu0 0
    %395 = vmatpush2.bf16.msra.mxu0 0
    %396 = vmatprep.subr.bf16.mxu0 0
    %397 = vmatpush2.bf16.msra.mxu0 0
    %398 = vmatprep.subr.bf16.mxu0 0
    %399 = vmatpush2.bf16.msra.mxu0 0
    %400 = vmatprep.subr.bf16.mxu0 0
    %401 = vmatpush2.bf16.msra.mxu0 0
    %402 = vmatprep.subr.bf16.mxu0 0
    %403 = vmatpush2.bf16.msra.mxu0 0
    %404 = vmatprep.subr.bf16.mxu0 0
    %405 = vmatpush2.bf16.msra.mxu0 0
    %406 = vmatprep.mubr.bf16.mxu0 0
    %407 = vmatmul.mubr.bf16.gmra.mxu0 %v302
    %v408 = vpop.f32.mrf.mxu0
    %v409 = vadd.f32 %v324, %v408
    %v410 = vpop.f32.mrf.mxu0
    %v411 = vpop.f32.mrf.mxu0
    %v412 = vadd.f32 %v324, %v411
    %v413 = vpop.f32.mrf.mxu0
    %414 = vdwg.mxu0
    %v415 = vpack.c.bf16 %v412, %v409
    %v417 = vunpack.c.l.b16 %v415
    %v418 = vunpack.c.h.b16 %v415
    %v419 = vpack.c.b16 %v417, %v417
    %v420 = vpack.c.b16 %v418, %v418
    %423 = vst [vmem:[#allocation8] sm:$0xf] %v419
    %424 = vst [vmem:[#allocation8 + $0x4] sm:$0xf] %v420
    // Predicated region
    $region34: #{tpu_custom_call.1} parent=1 // pred_check
      _
    $region35: #{tpu_custom_call.1} parent=1 // pred_check_branch
      %426 = sbr.rel (0) target = $region37
    $region36: #{tpu_custom_call.1} parent=1 // pred_region
      %s428 = ssub.s32 128, 128
      %429 = vsyncadd [#allocation4], %s428
      %s430 = sshll.u32 [#allocation8], 4
      %s431 = int_to_ptr.vmem [resolvable:$true] %s430
      %436 = dma.vmem_to_hbm [thread:$0]  %s431, 128, %s5, [#allocation4], 64, 64, 4
    $region37: #{tpu_custom_call.1} parent=1 // pred_fallthru
      _
    // Predicated region
    $region38: #{tpu_custom_call.1} parent=1 // pred_check
      _
    $region39: #{tpu_custom_call.1} parent=1 // pred_check_branch
      %438 = sbr.rel (0) target = $region41
    $region40: #{tpu_custom_call.1} parent=1 // pred_region
      %439 = dma.done [#allocation4], 128
    $region41: #{tpu_custom_call.1} parent=1 // pred_fallthru
      _
    %440 = vsyncpa [#allocation3], 1
    %441 = vsyncpa [#allocation6], 1
    %442 = vsyncpa [#allocation4], 1

// kernel: tpu_custom_call.1
$region0: #{tpu_custom_call.1}
  #allocation0 [shape = 'u32[]', space=smem, size = 0x4, offset = 0x4, fixed_abs, tag = 'smem constant byte address 0x4 - core index']
  #allocation1 [shape = 'u32[144,128]{1,0:T(1,128)}', space=vmem, size = 0x12000, scoped, tag = 'internal scratch']
  %s0 = inlined_call_operand.hbm [shape: bf16[16,128], index: 0, kind: input, shape index: {}]
  %s1 = inlined_call_operand.hbm [shape: bf16[2,128,128], index: 1, kind: input, shape index: {}]
  %s2 = inlined_call_operand.vmem [shape: f32[2,1,128], index: 2, kind: input, shape index: {}]
  %s3 = inlined_call_operand.hbm [shape: bf16[128,128], index: 3, kind: input, shape index: {}]
  %s4 = inlined_call_operand.vmem [shape: f32[1,128], index: 4, kind: input, shape index: {}]
  %s5 = inlined_call_operand.hbm [shape: bf16[16,128], index: 5, kind: output, shape index: {}]
  %s6 = sld [smem:[#allocation0]]
  $region42: #{tpu_custom_call.1} parent=0
    _
  %s8 = ssub.s32 1, %s6
  %s9 = scalar_select 0, %s8, %s6
  $region1: #{tpu_custom_call.1} parent=0
    #allocation2 [shape = 'u8[4096]{0}', space=vmem, size = 0x1000, scoped, tag = 'input window, operand 0, single buffered']
    #allocation3 [shape = 's32[1]{0}', space=sflag, size = 0x4, scoped, tag = 'scoped memory for tpu_custom_call.1']
    #allocation4 [shape = 's32[1]{0}', space=sflag, size = 0x4, scoped, tag = 'scoped memory for tpu_custom_call.1']
    #allocation5 [shape = 'u8[65536]{0}', space=vmem, size = 0x10000, scoped, tag = 'input window, operand 1, single buffered']
    #allocation6 [shape = 's32[1]{0}', space=sflag, size = 0x4, scoped, tag = 'scoped memory for tpu_custom_call.1']
    #allocation7 [shape = 'u8[32768]{0}', space=vmem, size = 0x8000, scoped, tag = 'input window, operand 3, single buffered']
    #allocation8 [shape = 'u8[4096]{0}', space=vmem, size = 0x1000, scoped, tag = 'output window, operand 0, single buffered']
    %10 = vsyncpa [#allocation3], 0
    %11 = vsyncpa [#allocation6], 0
    %12 = vsyncpa [#allocation4], 0
    // Predicated region
    $region2: #{tpu_custom_call.1} parent=1 // pred_check
      _
    $region3: #{tpu_custom_call.1} parent=1 // pred_check_branch
      %14 = sbr.rel (0) target = $region5
    $region4: #{tpu_custom_call.1} parent=1 // pred_region
      %s16 = ssub.s32 128, 128
      %17 = vsyncadd [#allocation3], %s16
      %s18 = sshll.u32 [#allocation2], 4
      %s19 = int_to_ptr.vmem [resolvable:$true] %s18
      %24 = dma.hbm_to_vmem [thread:$0]  %s0, 128, %s19, [#allocation3], 64, 64, 4
    $region5: #{tpu_custom_call.1} parent=1 // pred_fallthru
      _
    // Predicated region
    $region6: #{tpu_custom_call.1} parent=1 // pred_check
      _
    $region7: #{tpu_custom_call.1} parent=1 // pred_check_branch
      %26 = sbr.rel (0) target = $region9
    $region8: #{tpu_custom_call.1} parent=1 // pred_region
      %s28 = ssub.s32 2048, 2048
      %29 = vsyncadd [#allocation6], %s28
      %s30 = sshll.u32 [#allocation5], 4
      %s31 = int_to_ptr.vmem [resolvable:$true] %s30
      %36 = dma.hbm_to_vmem [thread:$0]  %s1, 2048, %s31, [#allocation6], 64, 64, 4
    $region9: #{tpu_custom_call.1} parent=1 // pred_fallthru
      _
    // Predicated region
    $region10: #{tpu_custom_call.1} parent=1 // pred_check
      _
    $region11: #{tpu_custom_call.1} parent=1 // pred_check_branch
      %38 = sbr.rel (0) target = $region13
    $region12: #{tpu_custom_call.1} parent=1 // pred_region
      _
    $region13: #{tpu_custom_call.1} parent=1 // pred_fallthru
      _
    // Predicated region
    $region14: #{tpu_custom_call.1} parent=1 // pred_check
      _
    $region15: #{tpu_custom_call.1} parent=1 // pred_check_branch
      %40 = sbr.rel (0) target = $region17
    $region16: #{tpu_custom_call.1} parent=1 // pred_region
      %s42 = ssub.s32 1024, 1024
      %43 = vsyncadd [#allocation6], %s42
      %s44 = sshll.u32 [#allocation7], 4
      %s45 = int_to_ptr.vmem [resolvable:$true] %s44
      %50 = dma.hbm_to_vmem [thread:$0]  %s3, 1024, %s45, [#allocation6], 64, 64, 4
    $region17: #{tpu_custom_call.1} parent=1 // pred_fallthru
      _
    // Predicated region
    $region18: #{tpu_custom_call.1} parent=1 // pred_check
      _
    $region19: #{tpu_custom_call.1} parent=1 // pred_check_branch
      %52 = sbr.rel (0) target = $region21
    $region20: #{tpu_custom_call.1} parent=1 // pred_region
      _
    $region21: #{tpu_custom_call.1} parent=1 // pred_fallthru
      _
    // Predicated region
    $region22: #{tpu_custom_call.1} parent=1 // pred_check
      _
    $region23: #{tpu_custom_call.1} parent=1 // pred_check_branch
      %54 = sbr.rel (0) target = $region25
    $region24: #{tpu_custom_call.1} parent=1 // pred_region
      %55 = dma.done [#allocation3], 128
    $region25: #{tpu_custom_call.1} parent=1 // pred_fallthru
      _
    // Predicated region
    $region26: #{tpu_custom_call.1} parent=1 // pred_check
      _
    $region27: #{tpu_custom_call.1} parent=1 // pred_check_branch
      %57 = sbr.rel (0) target = $region29
    $region28: #{tpu_custom_call.1} parent=1 // pred_region
      %58 = dma.done [#allocation6], 2048
    $region29: #{tpu_custom_call.1} parent=1 // pred_fallthru
      _
    // Predicated region
    $region30: #{tpu_custom_call.1} parent=1 // pred_check
      _
    $region31: #{tpu_custom_call.1} parent=1 // pred_check_branch
      %60 = sbr.rel (0) target = $region33
    $region32: #{tpu_custom_call.1} parent=1 // pred_region
      %61 = dma.done [#allocation6], 1024
    $region33: #{tpu_custom_call.1} parent=1 // pred_fallthru
      _
    %v63 = vld [vmem:[#allocation2] sm:$0xf]
    %v64 = vld [vmem:[#allocation2 + $0x4] sm:$0xf]
    %v65 = vld [vmem:[#allocation5] sm:$0xf]
    %v66 = vld [vmem:[#allocation5 + $0x4] sm:$0xf]
    %v67 = vld [vmem:[#allocation5 + $0x8] sm:$0xf]
    %v68 = vld [vmem:[#allocation5 + $0xc] sm:$0xf]
    %v69 = vld [vmem:[#allocation5 + $0x10] sm:$0xf]
    %v70 = vld [vmem:[#allocation5 + $0x14] sm:$0xf]
    %v71 = vld [vmem:[#allocation5 + $0x18] sm:$0xf]
    %v72 = vld [vmem:[#allocation5 + $0x1c] sm:$0xf]
    %v73 = vld [vmem:[#allocation5 + $0x20] sm:$0xf]
    %v74 = vld [vmem:[#allocation5 + $0x24] sm:$0xf]
    %v75 = vld [vmem:[#allocation5 + $0x28] sm:$0xf]
    %v76 = vld [vmem:[#allocation5 + $0x2c] sm:$0xf]
    %v77 = vld [vmem:[#allocation5 + $0x30] sm:$0xf]
    %v78 = vld [vmem:[#allocation5 + $0x34] sm:$0xf]
    %v79 = vld [vmem:[#allocation5 + $0x38] sm:$0xf]
    %v80 = vld [vmem:[#allocation5 + $0x3c] sm:$0xf]
    %v81 = vld [vmem:[%s2] sm:$0x1]
    %v83 = vlaneseq
    %v84 = vshrl.u32 %v83, 7
    %v85 = vsub.s32 0, %v84
    %v86 = vrot.slane %v81, %v85
    %v90 = vunpack.c.l.b16 %v63
    %v91 = vunpack.c.l.b16 %v64
    %v92 = vpack.c.b16 %v91, %v90
    %v110 = vunpack.c.l.b16 %v65
    %v111 = vunpack.c.l.b16 %v66
    %v112 = vunpack.c.l.b16 %v67
    %v113 = vunpack.c.l.b16 %v68
    %v114 = vunpack.c.l.b16 %v69
    %v115 = vunpack.c.l.b16 %v70
    %v116 = vunpack.c.l.b16 %v71
    %v117 = vunpack.c.l.b16 %v72
    %v118 = vunpack.c.l.b16 %v73
    %v119 = vunpack.c.l.b16 %v74
    %v120 = vunpack.c.l.b16 %v75
    %v121 = vunpack.c.l.b16 %v76
    %v122 = vunpack.c.l.b16 %v77
    %v123 = vunpack.c.l.b16 %v78
    %v124 = vunpack.c.l.b16 %v79
    %v125 = vunpack.c.l.b16 %v80
    %v126 = vpack.c.b16 %v111, %v110
    %v127 = vpack.c.b16 %v113, %v112
    %v128 = vpack.c.b16 %v115, %v114
    %v129 = vpack.c.b16 %v117, %v116
    %v130 = vpack.c.b16 %v119, %v118
    %v131 = vpack.c.b16 %v121, %v120
    %v132 = vpack.c.b16 %v123, %v122
    %v133 = vpack.c.b16 %v125, %v124
    %142 = vmatprep.subr.bf16.mxu0 0
    %143 = vmatpush1.bf16.msra.mxu0 %v133
    %144 = vmatprep.subr.bf16.mxu0 0
    %145 = vmatpush1.bf16.msra.mxu0 %v132
    %146 = vmatprep.subr.bf16.mxu0 0
    %147 = vmatpush1.bf16.msra.mxu0 %v131
    %148 = vmatprep.subr.bf16.mxu0 0
    %149 = vmatpush1.bf16.msra.mxu0 %v130
    %150 = vmatprep.subr.bf16.mxu0 0
    %151 = vmatpush1.bf16.msra.mxu0 %v129
    %152 = vmatprep.subr.bf16.mxu0 0
    %153 = vmatpush1.bf16.msra.mxu0 %v128
    %154 = vmatprep.subr.bf16.mxu0 0
    %155 = vmatpush1.bf16.msra.mxu0 %v127
    %156 = vmatprep.subr.bf16.mxu0 0
    %157 = vmatpush1.bf16.msra.mxu0 %v126
    %158 = vmatprep.subr.bf16.mxu0 0
    %159 = vmatpush2.bf16.msra.mxu0 0
    %160 = vmatprep.subr.bf16.mxu0 0
    %161 = vmatpush2.bf16.msra.mxu0 0
    %162 = vmatprep.subr.bf16.mxu0 0
    %163 = vmatpush2.bf16.msra.mxu0 0
    %164 = vmatprep.subr.bf16.mxu0 0
    %165 = vmatpush2.bf16.msra.mxu0 0
    %166 = vmatprep.subr.bf16.mxu0 0
    %167 = vmatpush2.bf16.msra.mxu0 0
    %168 = vmatprep.subr.bf16.mxu0 0
    %169 = vmatpush2.bf16.msra.mxu0 0
    %170 = vmatprep.subr.bf16.mxu0 0
    %171 = vmatpush2.bf16.msra.mxu0 0
    %172 = vmatprep.subr.bf16.mxu0 0
    %173 = vmatpush2.bf16.msra.mxu0 0
    %174 = vmatprep.mubr.bf16.mxu0 0
    %175 = vmatmul.mubr.bf16.gmra.mxu0 %v92
    %v176 = vpop.f32.mrf.mxu0
    %v177 = vadd.f32 %v86, %v176
    %v178 = vpop.f32.mrf.mxu0
    %v179 = vpop.f32.mrf.mxu0
    %v180 = vadd.f32 %v86, %v179
    %v181 = vpop.f32.mrf.mxu0
    %182 = vdwg.mxu0
    %v183 = vmax.f32 %v177, 0.0
    %v184 = vmax.f32 %v180, 0.0
    %v185 = vpack.c.bf16 %v184, %v183
    %s186 = scalar_lea.vmem [#allocation5], 64
    %v187 = vld [vmem:[%s186] sm:$0xf]
    %v188 = vld [vmem:[%s186 + $0x4] sm:$0xf]
    %v189 = vld [vmem:[%s186 + $0x8] sm:$0xf]
    %v190 = vld [vmem:[%s186 + $0xc] sm:$0xf]
    %v191 = vld [vmem:[%s186 + $0x10] sm:$0xf]
    %v192 = vld [vmem:[%s186 + $0x14] sm:$0xf]
    %v193 = vld [vmem:[%s186 + $0x18] sm:$0xf]
    %v194 = vld [vmem:[%s186 + $0x1c] sm:$0xf]
    %v195 = vld [vmem:[%s186 + $0x20] sm:$0xf]
    %v196 = vld [vmem:[%s186 + $0x24] sm:$0xf]
    %v197 = vld [vmem:[%s186 + $0x28] sm:$0xf]
    %v198 = vld [vmem:[%s186 + $0x2c] sm:$0xf]
    %v199 = vld [vmem:[%s186 + $0x30] sm:$0xf]
    %v200 = vld [vmem:[%s186 + $0x34] sm:$0xf]
    %v201 = vld [vmem:[%s186 + $0x38] sm:$0xf]
    %v202 = vld [vmem:[%s186 + $0x3c] sm:$0xf]
    %s203 = scalar_lea.vmem %s2, 1
    %v204 = vld [vmem:[%s203] sm:$0x1]
    %v206 = vlaneseq
    %v207 = vshrl.u32 %v206, 7
    %v208 = vsub.s32 0, %v207
    %v209 = vrot.slane %v204, %v208
    %v227 = vunpack.c.l.b16 %v187
    %v228 = vunpack.c.l.b16 %v188
    %v229 = vunpack.c.l.b16 %v189
    %v230 = vunpack.c.l.b16 %v190
    %v231 = vunpack.c.l.b16 %v191
    %v232 = vunpack.c.l.b16 %v192
    %v233 = vunpack.c.l.b16 %v193
    %v234 = vunpack.c.l.b16 %v194
    %v235 = vunpack.c.l.b16 %v195
    %v236 = vunpack.c.l.b16 %v196
    %v237 = vunpack.c.l.b16 %v197
    %v238 = vunpack.c.l.b16 %v198
    %v239 = vunpack.c.l.b16 %v199
    %v240 = vunpack.c.l.b16 %v200
    %v241 = vunpack.c.l.b16 %v201
    %v242 = vunpack.c.l.b16 %v202
    %v243 = vpack.c.b16 %v228, %v227
    %v244 = vpack.c.b16 %v230, %v229
    %v245 = vpack.c.b16 %v232, %v231
    %v246 = vpack.c.b16 %v234, %v233
    %v247 = vpack.c.b16 %v236, %v235
    %v248 = vpack.c.b16 %v238, %v237
    %v249 = vpack.c.b16 %v240, %v239
    %v250 = vpack.c.b16 %v242, %v241
    %259 = vmatprep.subr.bf16.mxu0 0
    %260 = vmatpush1.bf16.msra.mxu0 %v250
    %261 = vmatprep.subr.bf16.mxu0 0
    %262 = vmatpush1.bf16.msra.mxu0 %v249
    %263 = vmatprep.subr.bf16.mxu0 0
    %264 = vmatpush1.bf16.msra.mxu0 %v248
    %265 = vmatprep.subr.bf16.mxu0 0
    %266 = vmatpush1.bf16.msra.mxu0 %v247
    %267 = vmatprep.subr.bf16.mxu0 0
    %268 = vmatpush1.bf16.msra.mxu0 %v246
    %269 = vmatprep.subr.bf16.mxu0 0
    %270 = vmatpush1.bf16.msra.mxu0 %v245
    %271 = vmatprep.subr.bf16.mxu0 0
    %272 = vmatpush1.bf16.msra.mxu0 %v244
    %273 = vmatprep.subr.bf16.mxu0 0
    %274 = vmatpush1.bf16.msra.mxu0 %v243
    %275 = vmatprep.subr.bf16.mxu0 0
    %276 = vmatpush2.bf16.msra.mxu0 0
    %277 = vmatprep.subr.bf16.mxu0 0
    %278 = vmatpush2.bf16.msra.mxu0 0
    %279 = vmatprep.subr.bf16.mxu0 0
    %280 = vmatpush2.bf16.msra.mxu0 0
    %281 = vmatprep.subr.bf16.mxu0 0
    %282 = vmatpush2.bf16.msra.mxu0 0
    %283 = vmatprep.subr.bf16.mxu0 0
    %284 = vmatpush2.bf16.msra.mxu0 0
    %285 = vmatprep.subr.bf16.mxu0 0
    %286 = vmatpush2.bf16.msra.mxu0 0
    %287 = vmatprep.subr.bf16.mxu0 0
    %288 = vmatpush2.bf16.msra.mxu0 0
    %289 = vmatprep.subr.bf16.mxu0 0
    %290 = vmatpush2.bf16.msra.mxu0 0
    %291 = vmatprep.mubr.bf16.mxu0 0
    %292 = vmatmul.mubr.bf16.gmra.mxu0 %v185
    %v293 = vpop.f32.mrf.mxu0
    %v294 = vadd.f32 %v209, %v293
    %v295 = vpop.f32.mrf.mxu0
    %v296 = vpop.f32.mrf.mxu0
    %v297 = vadd.f32 %v209, %v296
    %v298 = vpop.f32.mrf.mxu0
    %299 = vdwg.mxu0
    %v300 = vmax.f32 %v294, 0.0
    %v301 = vmax.f32 %v297, 0.0
    %v302 = vpack.c.bf16 %v301, %v300
    %v303 = vld [vmem:[#allocation7] sm:$0xf]
    %v304 = vld [vmem:[#allocation7 + $0x4] sm:$0xf]
    %v305 = vld [vmem:[#allocation7 + $0x8] sm:$0xf]
    %v306 = vld [vmem:[#allocation7 + $0xc] sm:$0xf]
    %v307 = vld [vmem:[#allocation7 + $0x10] sm:$0xf]
    %v308 = vld [vmem:[#allocation7 + $0x14] sm:$0xf]
    %v309 = vld [vmem:[#allocation7 + $0x18] sm:$0xf]
    %v310 = vld [vmem:[#allocation7 + $0x1c] sm:$0xf]
    %v311 = vld [vmem:[#allocation7 + $0x20] sm:$0xf]
    %v312 = vld [vmem:[#allocation7 + $0x24] sm:$0xf]
    %v313 = vld [vmem:[#allocation7 + $0x28] sm:$0xf]
    %v314 = vld [vmem:[#allocation7 + $0x2c] sm:$0xf]
    %v315 = vld [vmem:[#allocation7 + $0x30] sm:$0xf]
    %v316 = vld [vmem:[#allocation7 + $0x34] sm:$0xf]
    %v317 = vld [vmem:[#allocation7 + $0x38] sm:$0xf]
    %v318 = vld [vmem:[#allocation7 + $0x3c] sm:$0xf]
    %v319 = vld [vmem:[%s4] sm:$0x1]
    %v321 = vlaneseq
    %v322 = vshrl.u32 %v321, 7
    %v323 = vsub.s32 0, %v322
    %v324 = vrot.slane %v319, %v323
    %v342 = vunpack.c.l.b16 %v303
    %v343 = vunpack.c.l.b16 %v304
    %v344 = vunpack.c.l.b16 %v305
    %v345 = vunpack.c.l.b16 %v306
    %v346 = vunpack.c.l.b16 %v307
    %v347 = vunpack.c.l.b16 %v308
    %v348 = vunpack.c.l.b16 %v309
    %v349 = vunpack.c.l.b16 %v310
    %v350 = vunpack.c.l.b16 %v311
    %v351 = vunpack.c.l.b16 %v312
    %v352 = vunpack.c.l.b16 %v313
    %v353 = vunpack.c.l.b16 %v314
    %v354 = vunpack.c.l.b16 %v315
    %v355 = vunpack.c.l.b16 %v316
    %v356 = vunpack.c.l.b16 %v317
    %v357 = vunpack.c.l.b16 %v318
    %v358 = vpack.c.b16 %v343, %v342
    %v359 = vpack.c.b16 %v345, %v344
    %v360 = vpack.c.b16 %v347, %v346
    %v361 = vpack.c.b16 %v349, %v348
    %v362 = vpack.c.b16 %v351, %v350
    %v363 = vpack.c.b16 %v353, %v352
    %v364 = vpack.c.b16 %v355, %v354
    %v365 = vpack.c.b16 %v357, %v356
    %374 = vmatprep.subr.bf16.mxu0 0
    %375 = vmatpush1.bf16.msra.mxu0 %v365
    %376 = vmatprep.subr.bf16.mxu0 0
    %377 = vmatpush1.bf16.msra.mxu0 %v364
    %378 = vmatprep.subr.bf16.mxu0 0
    %379 = vmatpush1.bf16.msra.mxu0 %v363
    %380 = vmatprep.subr.bf16.mxu0 0
    %381 = vmatpush1.bf16.msra.mxu0 %v362
    %382 = vmatprep.subr.bf16.mxu0 0
    %383 = vmatpush1.bf16.msra.mxu0 %v361
    %384 = vmatprep.subr.bf16.mxu0 0
    %385 = vmatpush1.bf16.msra.mxu0 %v360
    %386 = vmatprep.subr.bf16.mxu0 0
    %387 = vmatpush1.bf16.msra.mxu0 %v359
    %388 = vmatprep.subr.bf16.mxu0 0
    %389 = vmatpush1.bf16.msra.mxu0 %v358
    %390 = vmatprep.subr.bf16.mxu0 0
    %391 = vmatpush2.bf16.msra.mxu0 0
    %392 = vmatprep.subr.bf16.mxu0 0
    %393 = vmatpush2.bf16.msra.mxu0 0
    %394 = vmatprep.subr.bf16.mxu0 0
    %395 = vmatpush2.bf16.msra.mxu0 0
    %396 = vmatprep.subr.bf16.mxu0 0
    %397 = vmatpush2.bf16.msra.mxu0 0
    %398 = vmatprep.subr.bf16.mxu0 0
    %399 = vmatpush2.bf16.msra.mxu0 0
    %400 = vmatprep.subr.bf16.mxu0 0
    %401 = vmatpush2.bf16.msra.mxu0 0
    %402 = vmatprep.subr.bf16.mxu0 0
    %403 = vmatpush2.bf16.msra.mxu0 0
    %404 = vmatprep.subr.bf16.mxu0 0
    %405 = vmatpush2.bf16.msra.mxu0 0
    %406 = vmatprep.mubr.bf16.mxu0 0
    %407 = vmatmul.mubr.bf16.gmra.mxu0 %v302
    %v408 = vpop.f32.mrf.mxu0
    %v409 = vadd.f32 %v324, %v408
    %v410 = vpop.f32.mrf.mxu0
    %v411 = vpop.f32.mrf.mxu0
    %v412 = vadd.f32 %v324, %v411
    %v413 = vpop.f32.mrf.mxu0
    %414 = vdwg.mxu0
    %v415 = vpack.c.bf16 %v412, %v409
    %v417 = vunpack.c.l.b16 %v415
    %v418 = vunpack.c.h.b16 %v415
    %v419 = vpack.c.b16 %v417, %v417
    %v420 = vpack.c.b16 %v418, %v418
    %423 = vst [vmem:[#allocation8] sm:$0xf] %v419
    %424 = vst [vmem:[#allocation8 + $0x4] sm:$0xf] %v420
    // Predicated region
    $region34: #{tpu_custom_call.1} parent=1 // pred_check
      _
    $region35: #{tpu_custom_call.1} parent=1 // pred_check_branch
      %426 = sbr.rel (0) target = $region37
    $region36: #{tpu_custom_call.1} parent=1 // pred_region
      %s428 = ssub.s32 128, 128
      %429 = vsyncadd [#allocation4], %s428
      %s430 = sshll.u32 [#allocation8], 4
      %s431 = int_to_ptr.vmem [resolvable:$true] %s430
      %436 = dma.vmem_to_hbm [thread:$0]  %s431, 128, %s5, [#allocation4], 64, 64, 4
    $region37: #{tpu_custom_call.1} parent=1 // pred_fallthru
      _
    // Predicated region
    $region38: #{tpu_custom_call.1} parent=1 // pred_check
      _
    $region39: #{tpu_custom_call.1} parent=1 // pred_check_branch
      %438 = sbr.rel (0) target = $region41
    $region40: #{tpu_custom_call.1} parent=1 // pred_region
      %439 = dma.done [#allocation4], 128
    $region41: #{tpu_custom_call.1} parent=1 // pred_fallthru
      _
    %440 = vsyncpa [#allocation3], 1
    %441 = vsyncpa [#allocation6], 1
    %442 = vsyncpa [#allocation4], 1

</llo_original>
